<compile_context>
chip_gen: v5e
topology: v5e:2x2
jax: 0.10.0
libtpu: 0.0.40
codegen_flags: <defaults>
</compile_context>

<pallas_src>
import jax
import jax.numpy as jnp
from jax.experimental import pallas as pl
from jax.experimental.pallas import tpu as pltpu


def _augment_kernel(x_ref, t_ref, w0_ref, b0_ref, w1_ref, b1_ref, o_ref):
    # x_ref : (TB, L, C)        TB batch elements, original dtype (exact passthrough)
    # t_ref : (L_out, 1)        precomputed time channel (constant across grid)
    # w0_ref: (K*C, H0)         Conv1d weights, im2col-flattened WIO layout (MXU dtype)
    # b0_ref: (1, H0)  f32
    # w1_ref: (H0, H1)          1x1 conv == dense layer (MXU dtype)
    # b1_ref: (1, H1)  f32
    # o_ref : (TB, L_out, C_pad)  [original | time | augmented | zero pad]
    TB, L, C = x_ref.shape
    KC, H0 = w0_ref.shape
    H1 = w1_ref.shape[1]
    L_out = o_ref.shape[1]
    C_pad = o_ref.shape[2]
    K = L - L_out + 1
    C_out = C + 1 + H1
    mxu_dtype = w0_ref.dtype

    x = x_ref[...]                                     # (TB, L, C)

    # --- Conv1d(K, stride=1, padding=0, dilation=1) as ONE im2col matmul ---
    # lhs[b, i, j*C + c] = x[b, i + j, c]  matches w0.reshape(K*C, H0) ordering.
    taps = [x[:, j:j + L_out, :] for j in range(K)]    # K static shifted views
    lhs = jnp.concatenate(taps, axis=-1).astype(mxu_dtype)    # (TB, L_out, K*C)
    lhs2 = lhs.reshape(TB * L_out, KC)                 # fold batch into MXU M dim

    h = jnp.dot(lhs2, w0_ref[...], preferred_element_type=jnp.float32)
    h = h + b0_ref[...]                                # f32 bias add (VPU)
    h = jnp.maximum(h, 0.0)                            # ReLU in f32

    # --- 1x1 conv (pointwise dense layer) ---
    h = jnp.dot(h.astype(mxu_dtype), w1_ref[...],
                preferred_element_type=jnp.float32) + b1_ref[...]
    h3 = h.reshape(TB, L_out, H1).astype(o_ref.dtype)

    # --- assemble [original | time | augmented | pad] and store ONCE ---
    orig = x[:, K - 1:, :].astype(o_ref.dtype)         # exact passthrough (never bf16)
    time = jnp.broadcast_to(t_ref[...], (TB, L_out, 1)).astype(o_ref.dtype)
    pieces = [orig, time, h3]
    if C_pad > C_out:
        pieces.append(jnp.zeros((TB, L_out, C_pad - C_out), dtype=o_ref.dtype))
    o_ref[...] = jnp.concatenate(pieces, axis=-1)      # single lane-dense store


def _pick_tb(N, L, L_out, C, C_pad, target_m=512, vmem_budget=16 * 1024 * 1024):
    """Largest divisor of N with M = TB*L_out near target, VMEM-safe, and
    (when possible) leaving >=2 grid steps so both v7x TensorCores get work."""
    per_b = 2 * 4 * (L * C + L_out * C_pad)            # double-buffered in+out, f32
    cap = max(1, vmem_budget // max(per_b, 1))
    want = min(max(1, -(-target_m // max(L_out, 1))), cap)
    tb = 1
    for d in range(1, N + 1):
        if N % d == 0 and d <= want:
            tb = d
    if N // tb < 2:                                    # keep >=2 parallel steps (v7x)
        for d in range(tb - 1, 0, -1):
            if N % d == 0 and N // d >= 2:
                tb = d
                break
    return tb


def augment_forward(x, w0, b0, w1, b1, *, mxu_dtype=jnp.bfloat16):
    """x: (N, L, C). w0: (K, C, H0) WIO. Returns (N, L - K + 1, C + 1 + H1)."""
    N, L, C = x.shape
    K, _, H0 = w0.shape
    H1 = w1.shape[1]
    L_out = L - K + 1
    C_out = C + 1 + H1
    C_pad = ((C_out + 127) // 128) * 128               # lane-dense output slab

    TB = _pick_tb(N, L, L_out, C, C_pad)
    G = N // TB

    # time channel: torch.linspace(0, 1, L_out); guard L_out == 1 (torch gives 0)
    denom = max(L_out - 1, 1)
    t = (jnp.arange(L_out, dtype=jnp.float32) / denom)[:, None].astype(x.dtype)

    w0r = w0.reshape(K * C, H0).astype(mxu_dtype)      # im2col-flattened weights
    w1c = w1.astype(mxu_dtype)
    b0f = b0.reshape(1, H0).astype(jnp.float32)
    b1f = b1.reshape(1, H1).astype(jnp.float32)

    out_padded = pl.pallas_call(
        _augment_kernel,
        out_shape=jax.ShapeDtypeStruct((N, L_out, C_pad), x.dtype),
        grid_spec=pltpu.PrefetchScalarGridSpec(
            num_scalar_prefetch=0,
            grid=(G,),
            in_specs=[
                pl.BlockSpec((TB, L, C), lambda i: (i, 0, 0)),
                # constant index maps: fetched once, not re-DMA'd per step
                # (pl.Buffered(1) single-buffering left out: negligible at these sizes)
                pl.BlockSpec((L_out, 1), lambda i: (0, 0)),
                pl.BlockSpec((K * C, H0), lambda i: (0, 0)),
                pl.BlockSpec((1, H0), lambda i: (0, 0)),
                pl.BlockSpec((H0, H1), lambda i: (0, 0)),
                pl.BlockSpec((1, H1), lambda i: (0, 0)),
            ],
            out_specs=pl.BlockSpec((TB, L_out, C_pad), lambda i: (i, 0, 0)),
        ),
        compiler_params=pltpu.CompilerParams(
            dimension_semantics=("parallel",)),
    )(x, t, w0r, b0f, w1c, b1f)

    return out_padded[..., :C_out]                     # drop lane padding outside


def augment_ref(x, w0, b0, w1, b1, *, mxu_dtype=jnp.bfloat16):
    """Pure-JAX reference mirroring the PyTorch forward (same MXU dtype)."""
    N, L, C = x.shape
    K, _, H0 = w0.shape
    H1 = w1.shape[1]
    L_out = L - K + 1
    taps = [x[:, j:j + L_out, :] for j in range(K)]
    lhs = jnp.concatenate(taps, axis=-1).astype(mxu_dtype)
    h = jnp.einsum('nlk,kh->nlh', lhs, w0.reshape(K * C, H0).astype(mxu_dtype),
                   preferred_element_type=jnp.float32)
    h = jnp.maximum(h + b0.reshape(1, 1, H0).astype(jnp.float32), 0.0)
    h = jnp.einsum('nlh,hd->nld', h.astype(mxu_dtype), w1.astype(mxu_dtype),
                   preferred_element_type=jnp.float32) + b1.reshape(1, 1, H1)
    denom = max(L_out - 1, 1)
    time = (jnp.arange(L_out, dtype=jnp.float32) / denom)
    time = jnp.broadcast_to(time[None, :, None], (N, L_out, 1)).astype(x.dtype)
    return jnp.concatenate([x[:, K - 1:, :], time, h.astype(x.dtype)], axis=2)


if __name__ == "__main__":
    # Module config: Augment(in_channels=4, layer_sizes=(32, 8), kernel_size=3)
    N, L, C = 2, 16, 4
    K = 3
    H0, H1 = 32, 8

    key = jax.random.PRNGKey(0)
    kx, k0, kb0, k1, kb1 = jax.random.split(key, 5)

    x = jax.random.normal(kx, (N, L, C), dtype=jnp.float32)
    # deterministic synthetic parameters (shapes follow nn.Conv1d of the module)
    w0 = 0.1 * jax.random.normal(k0, (K, C, H0), dtype=jnp.float32)   # conv kernel, WIO
    b0 = 0.1 * jax.random.normal(kb0, (1, H0), dtype=jnp.float32)
    w1 = 0.1 * jax.random.normal(k1, (H0, H1), dtype=jnp.float32)     # 1x1 conv
    b1 = 0.1 * jax.random.normal(kb1, (1, H1), dtype=jnp.float32)

    out = jax.block_until_ready(augment_forward(x, w0, b0, w1, b1))
    ref = jax.block_until_ready(augment_ref(x, w0, b0, w1, b1))

    assert out.shape == (N, L - K + 1, C + 1 + H1), out.shape
    assert out.dtype == x.dtype, out.dtype
    err = float(jnp.max(jnp.abs(out - ref)))
    assert err < 1e-3, err
    # original stream must pass through exactly (never routed through bf16)
    assert jnp.array_equal(out[:, :, :C], x[:, K - 1:, :])
    print("KERNEL_OK")
</pallas_src>

<mosaic_0001>
module attributes {stable_mosaic.version = 11 : i64} {
  func.func @_augment_kernel(%arg0: i32, %arg1: memref<1x16x4xf32, #tpu.memory_space<vmem>>, %arg2: memref<14x1xf32, #tpu.memory_space<vmem>>, %arg3: memref<12x32xbf16, #tpu.memory_space<vmem>>, %arg4: memref<1x32xf32, #tpu.memory_space<vmem>>, %arg5: memref<32x8xbf16, #tpu.memory_space<vmem>>, %arg6: memref<1x8xf32, #tpu.memory_space<vmem>>, %arg7: memref<1x14x128xf32, #tpu.memory_space<vmem>>) attributes {dimension_semantics = [#tpu.dimension_semantics<parallel>], iteration_bounds = array<i64: 2>, scalar_prefetch = 0 : i64, scratch_operands = 0 : i64, tpu.core_type = #tpu.core_type<tc>, window_params = [{transform_indices = @transform_0, window_bounds = array<i64: 1, 16, 4>}, {pipeline_mode = #tpu.pipeline_mode<synchronous>, transform_indices = @transform_1, window_bounds = array<i64: 14, 1>}, {pipeline_mode = #tpu.pipeline_mode<synchronous>, transform_indices = @transform_2, window_bounds = array<i64: 12, 32>}, {pipeline_mode = #tpu.pipeline_mode<synchronous>, transform_indices = @transform_3, window_bounds = array<i64: 1, 32>}, {pipeline_mode = #tpu.pipeline_mode<synchronous>, transform_indices = @transform_4, window_bounds = array<i64: 32, 8>}, {pipeline_mode = #tpu.pipeline_mode<synchronous>, transform_indices = @transform_5, window_bounds = array<i64: 1, 8>}, {transform_indices = @transform_6, window_bounds = array<i64: 1, 14, 128>}]} {
    %c0 = arith.constant 0 : index
    %c0_0 = arith.constant 0 : index
    %c0_1 = arith.constant 0 : index
    %0 = vector.load %arg1[%c0, %c0_0, %c0_1] : memref<1x16x4xf32, #tpu.memory_space<vmem>>, vector<1x16x4xf32>
    %1 = vector.extract_strided_slice %0 {offsets = [0, 0, 0], sizes = [1, 14, 4], strides = [1, 1, 1]} : vector<1x16x4xf32> to vector<1x14x4xf32>
    %2 = vector.extract_strided_slice %0 {offsets = [0, 1, 0], sizes = [1, 14, 4], strides = [1, 1, 1]} : vector<1x16x4xf32> to vector<1x14x4xf32>
    %3 = vector.extract_strided_slice %0 {offsets = [0, 2, 0], sizes = [1, 14, 4], strides = [1, 1, 1]} : vector<1x16x4xf32> to vector<1x14x4xf32>
    %4 = tpu.concatenate %1, %2, %3 in 2 : vector<1x14x4xf32>, vector<1x14x4xf32>, vector<1x14x4xf32> -> vector<1x14x12xf32>
    %5 = arith.truncf %4 : vector<1x14x12xf32> to vector<1x14x12xbf16>
    %6 = vector.shape_cast %5 : vector<1x14x12xbf16> to vector<14x12xbf16>
    %c0_2 = arith.constant 0 : index
    %c0_3 = arith.constant 0 : index
    %7 = vector.load %arg3[%c0_2, %c0_3] : memref<12x32xbf16, #tpu.memory_space<vmem>>, vector<12x32xbf16>
    %cst = arith.constant dense<0.000000e+00> : vector<14x32xf32>
    %8 = tpu.matmul %6, %7, %cst {dimension_numbers = #tpu.dot_dimension_numbers<[1], [0], [0], [1], [0, 0, 1, 1], [], []>} : vector<14x12xbf16>, vector<12x32xbf16>, vector<14x32xf32> -> vector<14x32xf32>
    %c0_4 = arith.constant 0 : index
    %c0_5 = arith.constant 0 : index
    %9 = vector.load %arg4[%c0_4, %c0_5] : memref<1x32xf32, #tpu.memory_space<vmem>>, vector<1x32xf32>
    %10 = vector.broadcast %9 : vector<1x32xf32> to vector<14x32xf32>
    %11 = arith.addf %8, %10 : vector<14x32xf32>
    %cst_6 = arith.constant 0.000000e+00 : f32
    %12 = vector.broadcast %cst_6 : f32 to vector<14x32xf32>
    %13 = arith.maximumf %11, %12 : vector<14x32xf32>
    %14 = arith.truncf %13 : vector<14x32xf32> to vector<14x32xbf16>
    %c0_7 = arith.constant 0 : index
    %c0_8 = arith.constant 0 : index
    %15 = vector.load %arg5[%c0_7, %c0_8] : memref<32x8xbf16, #tpu.memory_space<vmem>>, vector<32x8xbf16>
    %cst_9 = arith.constant dense<0.000000e+00> : vector<14x8xf32>
    %16 = tpu.matmul %14, %15, %cst_9 {dimension_numbers = #tpu.dot_dimension_numbers<[1], [0], [0], [1], [0, 0, 1, 1], [], []>} : vector<14x32xbf16>, vector<32x8xbf16>, vector<14x8xf32> -> vector<14x8xf32>
    %c0_10 = arith.constant 0 : index
    %c0_11 = arith.constant 0 : index
    %17 = vector.load %arg6[%c0_10, %c0_11] : memref<1x8xf32, #tpu.memory_space<vmem>>, vector<1x8xf32>
    %18 = vector.broadcast %17 : vector<1x8xf32> to vector<14x8xf32>
    %19 = arith.addf %16, %18 : vector<14x8xf32>
    %20 = vector.shape_cast %19 : vector<14x8xf32> to vector<1x14x8xf32>
    %21 = vector.extract_strided_slice %0 {offsets = [0, 2, 0], sizes = [1, 14, 4], strides = [1, 1, 1]} : vector<1x16x4xf32> to vector<1x14x4xf32>
    %c0_12 = arith.constant 0 : index
    %c0_13 = arith.constant 0 : index
    %22 = vector.load %arg2[%c0_12, %c0_13] : memref<14x1xf32, #tpu.memory_space<vmem>>, vector<14x1xf32>
    %23 = vector.shape_cast %22 : vector<14x1xf32> to vector<1x14x1xf32>
    %cst_14 = arith.constant 0.000000e+00 : f32
    %24 = vector.broadcast %cst_14 : f32 to vector<1x14x115xf32>
    %25 = tpu.concatenate %21, %23, %20, %24 in 2 : vector<1x14x4xf32>, vector<1x14x1xf32>, vector<1x14x8xf32>, vector<1x14x115xf32> -> vector<1x14x128xf32>
    %c0_15 = arith.constant 0 : index
    %c0_16 = arith.constant 0 : index
    %c0_17 = arith.constant 0 : index
    %26 = vector.load %arg7[%c0_15, %c0_16, %c0_17] : memref<1x14x128xf32, #tpu.memory_space<vmem>>, vector<1x14x128xf32>
    tpu.vector_store %arg7[%c0_15, %c0_16, %c0_17], %25 {strides = array<i32>} : memref<1x14x128xf32, #tpu.memory_space<vmem>>, vector<1x14x128xf32>,
    return
  }
  func.func @transform_0(%arg0: i32) -> (i32, i32, i32) {
    %c0_i32 = arith.constant 0 : i32
    %c0_i32_0 = arith.constant 0 : i32
    %c0_i32_1 = arith.constant 0 : i32
    return %arg0, %c0_i32, %c0_i32_0 : i32, i32, i32
  }
  func.func @transform_1(%arg0: i32) -> (i32, i32) {
    %c0_i32 = arith.constant 0 : i32
    %c0_i32_0 = arith.constant 0 : i32
    %c0_i32_1 = arith.constant 0 : i32
    return %c0_i32, %c0_i32_0 : i32, i32
  }
  func.func @transform_2(%arg0: i32) -> (i32, i32) {
    %c0_i32 = arith.constant 0 : i32
    %c0_i32_0 = arith.constant 0 : i32
    %c0_i32_1 = arith.constant 0 : i32
    return %c0_i32, %c0_i32_0 : i32, i32
  }
  func.func @transform_3(%arg0: i32) -> (i32, i32) {
    %c0_i32 = arith.constant 0 : i32
    %c0_i32_0 = arith.constant 0 : i32
    %c0_i32_1 = arith.constant 0 : i32
    return %c0_i32, %c0_i32_0 : i32, i32
  }
  func.func @transform_4(%arg0: i32) -> (i32, i32) {
    %c0_i32 = arith.constant 0 : i32
    %c0_i32_0 = arith.constant 0 : i32
    %c0_i32_1 = arith.constant 0 : i32
    return %c0_i32, %c0_i32_0 : i32, i32
  }
  func.func @transform_5(%arg0: i32) -> (i32, i32) {
    %c0_i32 = arith.constant 0 : i32
    %c0_i32_0 = arith.constant 0 : i32
    %c0_i32_1 = arith.constant 0 : i32
    return %c0_i32, %c0_i32_0 : i32, i32
  }
  func.func @transform_6(%arg0: i32) -> (i32, i32, i32) {
    %c0_i32 = arith.constant 0 : i32
    %c0_i32_0 = arith.constant 0 : i32
    %c0_i32_1 = arith.constant 0 : i32
    return %arg0, %c0_i32, %c0_i32_0 : i32, i32, i32
  }
}

</mosaic_0001>

<llo_original>
// kernel: tpu_custom_call.1
$region0: #{tpu_custom_call.1}
  #allocation0 [shape = 'u32[]', space=smem, size = 0x4, offset = 0x4, fixed_abs, tag = 'smem constant byte address 0x4 - core index']
  #allocation1 [shape = 'u32[72,128]{1,0:T(1,128)}', space=vmem, size = 0x9000, scoped, tag = 'internal scratch']
  %s0 = inlined_call_operand.vmem [shape: f32[2,16,4], index: 0, kind: input, shape index: {}]
  %s1 = inlined_call_operand.vmem [shape: f32[14,1], index: 1, kind: input, shape index: {}]
  %s2 = inlined_call_operand.vmem [shape: bf16[12,32], index: 2, kind: input, shape index: {}]
  %s3 = inlined_call_operand.vmem [shape: f32[1,32], index: 3, kind: input, shape index: {}]
  %s4 = inlined_call_operand.vmem [shape: bf16[32,8], index: 4, kind: input, shape index: {}]
  %s5 = inlined_call_operand.vmem [shape: f32[1,8], index: 5, kind: input, shape index: {}]
  %s6 = inlined_call_operand.vmem [shape: f32[2,14,128], index: 6, kind: output, shape index: {}]
  %s7 = sld [smem:[#allocation0]]
  $region57: #{tpu_custom_call.1} parent=0
    _
  %s9 = ssub.s32 1, %s7
  %s10 = scalar_select 0, %s9, %s7
  loop: start=0, step=1, limit=4
  $region2: #{tpu_custom_call.1} parent=0 // loop_pre_header
    _
  $region3: #{tpu_custom_call.1} parent=0 // loop_header
    %s12 = sphi 0, %s16
    %p13 = scmp.ge.s32.totalorder %s12, 4
    %s22 = sphi 0, %s24
    %s25 = sphi 0, %s22
    %s26 = sphi 0, %s25
    %s42 = sphi 0, %s26
    %s46 = sphi 0, %s46
    %s48 = sphi 0, %s46
    %s49 = sphi 0, %s48
    %s63 = sphi 0, %s49
    %s67 = sphi 0, %s67
    %s69 = sphi 0, %s67
    %s70 = sphi 0, %s69
    %s84 = sphi 0, %s70
    %s88 = sphi 0, %s88
    %s90 = sphi 0, %s88
    %s91 = sphi 0, %s90
    %s105 = sphi 0, %s91
    %s109 = sphi 0, %s109
    %s111 = sphi 0, %s109
    %s112 = sphi 0, %s111
    %s126 = sphi 0, %s112
    %s130 = sphi 0, %s130
    %s132 = sphi 0, %s130
    %s133 = sphi 0, %s132
    %s147 = sphi 0, %s133
    %s153 = sphi 0, %s155
    %s156 = sphi 0, %s153
    %s157 = sphi 0, %s156
    %s173 = sphi 0, %s157
  $region4: #{tpu_custom_call.1} parent=0 // loop_header_branch
    %15 = sbr.rel (%p13) target = $region8
  $region5: #{tpu_custom_call.1} parent=0 // loop_body
    %s17 = ssub.s32 %s12, 1
    %s18 = ssub.s32 %s12, 2
    %s19 = sadd.s32 %s12, 1
    %s20 = ssub.s32 %s12, %s19
    %p21 = scmp.eq.s32.totalorder %s20, 0
    %s23 = sadd.s32 %s22, 1
    %s24 = scalar_select %p21, %s22, %s23
    %p27 = pneg %p21
    %p28 = scmp.eq.s32.totalorder %s12, 1
    %p29 = por %p27, %p28
    %p30 = scmp.ne.s32.totalorder %s22, %s25
    %p31 = scmp.eq.s32.totalorder %s12, 0
    %p32 = por %p30, %p31
    %p33 = scmp.ne.s32.totalorder %s22, %s25
    %p34 = scmp.eq.s32.totalorder %s17, 1
    %p35 = por %p33, %p34
    %p36 = scmp.ne.s32.totalorder %s25, %s26
    %p37 = scmp.eq.s32.totalorder %s17, 0
    %p38 = por %p36, %p37
    %p39 = scmp.ne.s32.totalorder %s25, %s26
    %p40 = scmp.eq.s32.totalorder %s18, 1
    %p41 = por %p39, %p40
    %p43 = scmp.ne.s32.totalorder %s26, %s42
    %p44 = scmp.eq.s32.totalorder %s18, 0
    %p45 = por %p43, %p44
    %s47 = sadd.s32 %s46, 1
    %p50 = scmp.eq.s32.totalorder %s12, 1
    %p51 = scmp.ne.s32.totalorder %s46, %s48
    %p52 = scmp.eq.s32.totalorder %s12, 0
    %p53 = por %p51, %p52
    %p54 = scmp.ne.s32.totalorder %s46, %s48
    %p55 = scmp.eq.s32.totalorder %s17, 1
    %p56 = por %p54, %p55
    %p57 = scmp.ne.s32.totalorder %s48, %s49
    %p58 = scmp.eq.s32.totalorder %s17, 0
    %p59 = por %p57, %p58
    %p60 = scmp.ne.s32.totalorder %s48, %s49
    %p61 = scmp.eq.s32.totalorder %s18, 1
    %p62 = por %p60, %p61
    %p64 = scmp.ne.s32.totalorder %s49, %s63
    %p65 = scmp.eq.s32.totalorder %s18, 0
    %p66 = por %p64, %p65
    %s68 = sadd.s32 %s67, 1
    %p71 = scmp.eq.s32.totalorder %s12, 1
    %p72 = scmp.ne.s32.totalorder %s67, %s69
    %p73 = scmp.eq.s32.totalorder %s12, 0
    %p74 = por %p72, %p73
    %p75 = scmp.ne.s32.totalorder %s67, %s69
    %p76 = scmp.eq.s32.totalorder %s17, 1
    %p77 = por %p75, %p76
    %p78 = scmp.ne.s32.totalorder %s69, %s70
    %p79 = scmp.eq.s32.totalorder %s17, 0
    %p80 = por %p78, %p79
    %p81 = scmp.ne.s32.totalorder %s69, %s70
    %p82 = scmp.eq.s32.totalorder %s18, 1
    %p83 = por %p81, %p82
    %p85 = scmp.ne.s32.totalorder %s70, %s84
    %p86 = scmp.eq.s32.totalorder %s18, 0
    %p87 = por %p85, %p86
    %s89 = sadd.s32 %s88, 1
    %p92 = scmp.eq.s32.totalorder %s12, 1
    %p93 = scmp.ne.s32.totalorder %s88, %s90
    %p94 = scmp.eq.s32.totalorder %s12, 0
    %p95 = por %p93, %p94
    %p96 = scmp.ne.s32.totalorder %s88, %s90
    %p97 = scmp.eq.s32.totalorder %s17, 1
    %p98 = por %p96, %p97
    %p99 = scmp.ne.s32.totalorder %s90, %s91
    %p100 = scmp.eq.s32.totalorder %s17, 0
    %p101 = por %p99, %p100
    %p102 = scmp.ne.s32.totalorder %s90, %s91
    %p103 = scmp.eq.s32.totalorder %s18, 1
    %p104 = por %p102, %p103
    %p106 = scmp.ne.s32.totalorder %s91, %s105
    %p107 = scmp.eq.s32.totalorder %s18, 0
    %p108 = por %p106, %p107
    %s110 = sadd.s32 %s109, 1
    %p113 = scmp.eq.s32.totalorder %s12, 1
    %p114 = scmp.ne.s32.totalorder %s109, %s111
    %p115 = scmp.eq.s32.totalorder %s12, 0
    %p116 = por %p114, %p115
    %p117 = scmp.ne.s32.totalorder %s109, %s111
    %p118 = scmp.eq.s32.totalorder %s17, 1
    %p119 = por %p117, %p118
    %p120 = scmp.ne.s32.totalorder %s111, %s112
    %p121 = scmp.eq.s32.totalorder %s17, 0
    %p122 = por %p120, %p121
    %p123 = scmp.ne.s32.totalorder %s111, %s112
    %p124 = scmp.eq.s32.totalorder %s18, 1
    %p125 = por %p123, %p124
    %p127 = scmp.ne.s32.totalorder %s112, %s126
    %p128 = scmp.eq.s32.totalorder %s18, 0
    %p129 = por %p127, %p128
    %s131 = sadd.s32 %s130, 1
    %p134 = scmp.eq.s32.totalorder %s12, 1
    %p135 = scmp.ne.s32.totalorder %s130, %s132
    %p136 = scmp.eq.s32.totalorder %s12, 0
    %p137 = por %p135, %p136
    %p138 = scmp.ne.s32.totalorder %s130, %s132
    %p139 = scmp.eq.s32.totalorder %s17, 1
    %p140 = por %p138, %p139
    %p141 = scmp.ne.s32.totalorder %s132, %s133
    %p142 = scmp.eq.s32.totalorder %s17, 0
    %p143 = por %p141, %p142
    %p144 = scmp.ne.s32.totalorder %s132, %s133
    %p145 = scmp.eq.s32.totalorder %s18, 1
    %p146 = por %p144, %p145
    %p148 = scmp.ne.s32.totalorder %s133, %s147
    %p149 = scmp.eq.s32.totalorder %s18, 0
    %p150 = por %p148, %p149
    %s151 = ssub.s32 %s12, %s19
    %p152 = scmp.eq.s32.totalorder %s151, 0
    %s154 = sadd.s32 %s153, 1
    %s155 = scalar_select %p152, %s153, %s154
    %p158 = pneg %p152
    %p159 = scmp.eq.s32.totalorder %s12, 1
    %p160 = por %p158, %p159
    %p161 = scmp.ne.s32.totalorder %s153, %s156
    %p162 = scmp.eq.s32.totalorder %s12, 0
    %p163 = por %p161, %p162
    %p164 = scmp.ne.s32.totalorder %s153, %s156
    %p165 = scmp.eq.s32.totalorder %s17, 1
    %p166 = por %p164, %p165
    %p167 = scmp.ne.s32.totalorder %s156, %s157
    %p168 = scmp.eq.s32.totalorder %s17, 0
    %p169 = por %p167, %p168
    %p170 = scmp.ne.s32.totalorder %s156, %s157
    %p171 = scmp.eq.s32.totalorder %s18, 1
    %p172 = por %p170, %p171
    %p174 = scmp.ne.s32.totalorder %s157, %s173
    %p175 = scmp.eq.s32.totalorder %s18, 0
    %p176 = por %p174, %p175
    %p177 = scmp.le.s32.totalorder 1, %s12
    %p178 = scmp.lt.s32.totalorder %s12, 3
    %p179 = pnand %p177, %p178
    %p180 = pneg %p179
    // Predicated region
    $region9: #{tpu_custom_call.1} parent=5 // pred_check
      _
    $region10: #{tpu_custom_call.1} parent=5 // pred_check_branch
      %182 = sbr.rel (%p179) target = $region12
    $region11: #{tpu_custom_call.1} parent=5 // pred_region
      %s183 = ssub.s32 %s12, 1
      // Predicated region
      $region13: #{tpu_custom_call.1} parent=11 // pred_check
        %p184 = pneg %p59
      $region14: #{tpu_custom_call.1} parent=11 // pred_check_branch
        %186 = sbr.rel (%p184) target = $region16
      $region15: #{tpu_custom_call.1} parent=11 // pred_region
        _
      $region16: #{tpu_custom_call.1} parent=11 // pred_fallthru
        _
      // Predicated region
      $region17: #{tpu_custom_call.1} parent=11 // pred_check
        %p187 = pneg %p80
      $region18: #{tpu_custom_call.1} parent=11 // pred_check_branch
        %189 = sbr.rel (%p187) target = $region20
      $region19: #{tpu_custom_call.1} parent=11 // pred_region
        _
      $region20: #{tpu_custom_call.1} parent=11 // pred_fallthru
        _
      // Predicated region
      $region21: #{tpu_custom_call.1} parent=11 // pred_check
        %p190 = pneg %p101
      $region22: #{tpu_custom_call.1} parent=11 // pred_check_branch
        %192 = sbr.rel (%p190) target = $region24
      $region23: #{tpu_custom_call.1} parent=11 // pred_region
        _
      $region24: #{tpu_custom_call.1} parent=11 // pred_fallthru
        _
      // Predicated region
      $region25: #{tpu_custom_call.1} parent=11 // pred_check
        %p193 = pneg %p122
      $region26: #{tpu_custom_call.1} parent=11 // pred_check_branch
        %195 = sbr.rel (%p193) target = $region28
      $region27: #{tpu_custom_call.1} parent=11 // pred_region
        _
      $region28: #{tpu_custom_call.1} parent=11 // pred_fallthru
        _
      // Predicated region
      $region29: #{tpu_custom_call.1} parent=11 // pred_check
        %p196 = pneg %p143
      $region30: #{tpu_custom_call.1} parent=11 // pred_check_branch
        %198 = sbr.rel (%p196) target = $region32
      $region31: #{tpu_custom_call.1} parent=11 // pred_region
        _
      $region32: #{tpu_custom_call.1} parent=11 // pred_fallthru
        _
    $region12: #{tpu_custom_call.1} parent=5 // pred_fallthru
      _
    %p199 = scmp.lt.s32.totalorder %s12, 2
    // Predicated region
    $region33: #{tpu_custom_call.1} parent=5 // pred_check
      %p200 = pneg %p199
    $region34: #{tpu_custom_call.1} parent=5 // pred_check_branch
      %202 = sbr.rel (%p200) target = $region36
    $region35: #{tpu_custom_call.1} parent=5 // pred_region
      // Predicated region
      $region37: #{tpu_custom_call.1} parent=35 // pred_check
        %p203 = pneg %p32
      $region38: #{tpu_custom_call.1} parent=35 // pred_check_branch
        %205 = sbr.rel (%p203) target = $region40
      $region39: #{tpu_custom_call.1} parent=35 // pred_region
        %p206 = scmp.lt.s32.totalorder %s12, 1
        %s207 = scalar_select %p206, %s12, 1
        %s208 = smul.addr %s207, 2
        %s209 = smul.addr %s208, 8
        %s210 = scalar_lea.vmem %s0, %s209
      $region40: #{tpu_custom_call.1} parent=35 // pred_fallthru
        _
    $region36: #{tpu_custom_call.1} parent=5 // pred_fallthru
      _
    %p211 = scmp.le.s32.totalorder 1, %s12
    %p212 = scmp.lt.s32.totalorder %s12, 3
    %p213 = pnand %p211, %p212
    %p214 = pneg %p213
    // Predicated region
    $region41: #{tpu_custom_call.1} parent=5 // pred_check
      _
    $region42: #{tpu_custom_call.1} parent=5 // pred_check_branch
      %216 = sbr.rel (%p213) target = $region44
    $region43: #{tpu_custom_call.1} parent=5 // pred_region
      %s217 = ssub.s32 %s12, 1
      %p218 = scmp.lt.s32.totalorder %s17, 1
      %s219 = scalar_select %p218, %s17, 1
      %s220 = smul.addr %s219, 2
      %s221 = smul.addr %s220, 8
      %s222 = scalar_lea.vmem %s0, %s221
      %p223 = pneg %p38
      %p224 = pneg %p35
      %p225 = pneg %p59
      %p226 = pneg %p56
      %p227 = pneg %p80
      %p228 = pneg %p77
      %p229 = pneg %p101
      %p230 = pneg %p98
      %p231 = pneg %p122
      %p232 = pneg %p119
      %p233 = pneg %p143
      %p234 = pneg %p140
      %p235 = pneg %p169
      %p236 = pneg %p166
      %p237 = scmp.lt.s32.totalorder %s17, 1
      %s238 = scalar_select %p237, %s17, 1
      %s239 = smul.addr %s238, 2
      %s240 = smul.addr %s239, 8
      %s241 = scalar_lea.vmem %s6, %s240
      %p242 = scmp.lt.s32.totalorder %s17, 1
      %s243 = scalar_select %p242, %s17, 1
      %s244 = smul.addr %s243, 2
      %s245 = smul.addr %s244, 8
      %s246 = scalar_lea.vmem %s0, %s245
      %p247 = scmp.lt.s32.totalorder %s17, 1
      %s248 = scalar_select %p247, %s17, 1
      %s249 = smul.addr %s248, 2
      %s250 = smul.addr %s249, 8
      %s251 = scalar_lea.vmem %s6, %s250
      %v253 = vld [vmem:[%s246] sm:$0xff]
      %v254 = vld [vmem:[%s246 + $0x8] sm:$0xff]
      %vm257 = vcmask 1046528
      %v258 = vrot.slane %v253, 1
      %v259 = vrot.slane %v254, 1
      %v260 = vsel %vm257, %v258, %v259
      %261 = vrot.lane.b32.xlu0 %v260, 4
      %v262 = vpop.permute.xlu0 %261
      %263 = vrot.lane.b32.xlu0 %v259, 4
      %v264 = vpop.permute.xlu0 %263
      %vm267 = vcmask 1045504
      %v268 = vrot.slane %v253, 2
      %v269 = vrot.slane %v254, 2
      %v270 = vsel %vm267, %v268, %v269
      %271 = vrot.lane.b32.xlu0 %v270, 8
      %v272 = vpop.permute.xlu0 %271
      %273 = vrot.lane.b32.xlu0 %v269, 8
      %v274 = vpop.permute.xlu0 %273
      %vm277 = vcmask 31744
      %v278 = vsel %vm277, %v253, %v262
      %v279 = vsel %vm277, %v254, %v264
      %vm280 = vcmask 64512
      %v281 = vsel %vm280, %v278, %v272
      %v282 = vsel %vm280, %v279, %v274
      %v283 = vpack.c.bf16 %v281, %v281
      %v284 = vpack.c.bf16 %v282, %v282
      %v285 = vld [vmem:[%s2] sm:$0xf]
      %v286 = vld [vmem:[%s2 + $0x4] sm:$0x3]
      %v287 = vld [vmem:[%s3] sm:$0x1]
      %v289 = vperm.slane %v287, 0
      %v293 = vunpack.c.l.b16 %v283
      %v294 = vunpack.c.l.b16 %v284
      %v295 = vpack.c.b16 %v294, %v293
      %v298 = vunpack.c.l.b16 %v285
      %v299 = vunpack.c.l.b16 %v286
      %v300 = vpack.c.b16 %v299, %v298
      %vm301 = vcmask 97280
      %v303 = vsel %vm301, %v295, 0
      %v306 = vsel %vm267, %v300, 0
      %308 = vmatpush.bf16.msra.mxu0 0
      %309 = vmatpush.bf16.msra.mxu0 0
      %310 = vmatpush.bf16.msra.mxu0 0
      %311 = vmatpush.bf16.msra.mxu0 0
      %312 = vmatpush.bf16.msra.mxu0 0
      %313 = vmatpush.bf16.msra.mxu0 0
      %314 = vmatpush.bf16.msra.mxu0 0
      %315 = vmatpush.bf16.msra.mxu0 %v306
      %316 = vmatmul.bf16.gmra.mxu0 %v303
      %v317 = vpop.f32.mrf.mxu0
      %v318 = vadd.f32 %v289, %v317
      %v319 = vpop.f32.mrf.mxu0
      %v320 = vadd.f32 %v289, %v319
      %321 = vdwg.mxu0
      %v322 = vmax.f32 %v318, 0.0
      %v323 = vmax.f32 %v320, 0.0
      %v324 = vpack.c.bf16 %v323, %v322
      %v325 = vld [vmem:[%s4] sm:$0xf]
      %v326 = vld [vmem:[%s4 + $0x4] sm:$0xf]
      %v327 = vld [vmem:[%s4 + $0x8] sm:$0xf]
      %v328 = vld [vmem:[%s4 + $0xc] sm:$0xf]
      %v329 = vld [vmem:[%s5] sm:$0x1]
      %v331 = vperm.slane %v329, 0
      %v337 = vunpack.c.l.b16 %v325
      %v338 = vunpack.c.l.b16 %v326
      %v339 = vunpack.c.l.b16 %v327
      %v340 = vunpack.c.l.b16 %v328
      %v341 = vpack.c.b16 %v338, %v337
      %v342 = vpack.c.b16 %v340, %v339
      %vm345 = vcmask 261120
      %v347 = vsel %vm345, %v324, 0
      %349 = vmatpush.bf16.msra.mxu0 0
      %350 = vmatpush.bf16.msra.mxu0 0
      %351 = vmatpush.bf16.msra.mxu0 0
      %352 = vmatpush.bf16.msra.mxu0 0
      %353 = vmatpush.bf16.msra.mxu0 0
      %354 = vmatpush.bf16.msra.mxu0 0
      %355 = vmatpush.bf16.msra.mxu0 %v342
      %356 = vmatpush.bf16.msra.mxu0 %v341
      %357 = vmatmul.bf16.gmra.mxu0 %v347
      %v358 = vpop.f32.mrf.mxu0
      %v359 = vadd.f32 %v331, %v358
      %v360 = vpop.f32.mrf.mxu0
      %v361 = vadd.f32 %v331, %v360
      %362 = vdwg.mxu0
      %v363 = vld [vmem:[%s1] sm:$0xff]
      %v364 = vld [vmem:[%s1 + $0x8] sm:$0x3f]
      %vm367 = vcmask 1041408
      %v368 = vrot.slane %v363, 6
      %v369 = vrot.slane %v364, 6
      %v370 = vsel %vm367, %v368, %v369
      %371 = vrot.lane.b32.xlu0 %v368, 4
      %v372 = vpop.permute.xlu0 %371
      %373 = vrot.lane.b32.xlu0 %v370, 4
      %v374 = vpop.permute.xlu0 %373
      %v379 = vrot.slane %v359, 6
      %v380 = vrot.slane %v361, 6
      %v381 = vsel %vm367, %v379, %v380
      %382 = vrot.lane.b32.xlu0 %v379, 5
      %v383 = vpop.permute.xlu0 %382
      %384 = vrot.lane.b32.xlu0 %v381, 5
      %v385 = vpop.permute.xlu0 %384
      %v388 = vsel %vm277, %v253, %v372
      %v389 = vsel %vm277, %v254, %v374
      %vm390 = vcmask 39936
      %v391 = vsel %vm390, %v388, %v383
      %v392 = vsel %vm390, %v389, %v385
      %vm393 = vcmask 105472
      %v394 = vsel %vm393, %v391, 0.0
      %v395 = vsel %vm393, %v392, 0.0
      %396 = vst [vmem:[%s251 - $0x2] sm:$0xfc] %v394
      %397 = vst [vmem:[%s251 + $0x6] sm:$0xff] %v395
      %p398 = scmp.lt.s32.totalorder %s17, 1
      %s399 = scalar_select %p398, %s17, 1
      %s400 = smul.addr %s399, 2
      %s401 = smul.addr %s400, 8
      %s402 = scalar_lea.vmem %s6, %s401
      // Predicated region
      $region45: #{tpu_custom_call.1} parent=43 // pred_check
        %p403 = pneg %p166
      $region46: #{tpu_custom_call.1} parent=43 // pred_check_branch
        %405 = sbr.rel (%p403) target = $region48
      $region47: #{tpu_custom_call.1} parent=43 // pred_region
        _
      $region48: #{tpu_custom_call.1} parent=43 // pred_fallthru
        _
    $region44: #{tpu_custom_call.1} parent=5 // pred_fallthru
      _
    %p406 = scmp.le.s32.totalorder 2, %s12
    // Predicated region
    $region49: #{tpu_custom_call.1} parent=5 // pred_check
      %p407 = pneg %p406
    $region50: #{tpu_custom_call.1} parent=5 // pred_check_branch
      %409 = sbr.rel (%p407) target = $region52
    $region51: #{tpu_custom_call.1} parent=5 // pred_region
      %s410 = ssub.s32 %s12, 2
      // Predicated region
      $region53: #{tpu_custom_call.1} parent=51 // pred_check
        %p411 = pneg %p172
      $region54: #{tpu_custom_call.1} parent=51 // pred_check_branch
        %413 = sbr.rel (%p411) target = $region56
      $region55: #{tpu_custom_call.1} parent=51 // pred_region
        %p414 = scmp.lt.s32.totalorder %s18, 1
        %s415 = scalar_select %p414, %s18, 1
        %s416 = smul.addr %s415, 2
        %s417 = smul.addr %s416, 8
        %s418 = scalar_lea.vmem %s6, %s417
      $region56: #{tpu_custom_call.1} parent=51 // pred_fallthru
        _
    $region52: #{tpu_custom_call.1} parent=5 // pred_fallthru
      _
  $region6: #{tpu_custom_call.1} parent=0 // loop_footer
    %s16 = sadd.s32 1, %s12
  $region7: #{tpu_custom_call.1} parent=0 // loop_footer_branch
    %11 = sbr.rel target = $region3
  $region8: #{tpu_custom_call.1} parent=0 // loop_exit
    _

</llo_original>
